<compile_context>
chip_gen: v6e
topology: v6e:2x2x1
jax: 0.10.0
libtpu: 0.0.40
codegen_flags: <defaults>
</compile_context>

<pallas_src>
import math
from functools import partial

import jax
import jax.numpy as jnp
from jax import lax
from jax.experimental import pallas as pl
from jax.experimental.pallas import tpu as pltpu


def _pow_int_neg(dens, p_int):
    """dens ** (-p_int) via reciprocal + exponentiation-by-squaring (no log/exp)."""
    if p_int == 0:
        return jnp.ones_like(dens)
    base = pl.reciprocal(dens, approx=False)   # exact; Newton step rides idle VPU slots
    acc = None
    n = p_int
    while n:                                   # unrolled at trace time
        if n & 1:
            acc = base if acc is None else acc * base
        n >>= 1
        if n:
            base = base * base
    return acc


def _loss_kernel(dens_ref, comp_ref, out_ref, *, penalization):
    # dens_ref : VMEM (Bb, H, W) f32  -- a block of batch elements (densities)
    # comp_ref : VMEM (Bb, W, H) f32  -- matching compliances in native flat order
    # out_ref  : VMEM (Bb, 1, 4) f32  -- [compliance_sum, dens_sum, unc_sum, cb_abs_sum]
    dens = dens_ref[...]
    comp = comp_ref[...]
    Bb, H, W = dens.shape

    # ---- densities^(-p): exponent specialized at trace time -------------------
    p = float(penalization)
    p_int = int(round(p))
    if abs(p - p_int) < 1e-12 and 0 <= p_int <= 16:
        rp = _pow_int_neg(dens, p_int)                       # (Bb, H, W)
    else:
        # non-integer exponent fallback (densities > 0)
        rp = jnp.exp(-p * jnp.log(dens))

    # ---- compliance term: sum_{w,h} comp[b,w,h]*dens[b,h,w]^-p = trace(comp@rp) --
    cm = jnp.einsum("bwh,bhk->bwk", comp, rp,
                    preferred_element_type=jnp.float32)      # (Bb, W, W) on MXU
    rr = lax.broadcasted_iota(jnp.int32, (Bb, W, W), 1)
    cc = lax.broadcasted_iota(jnp.int32, (Bb, W, W), 2)
    diag = jnp.where(rr == cc, cm, 0.0)
    comp_term = jnp.sum(jnp.sum(diag, axis=2, keepdims=True),
                        axis=1, keepdims=True)               # (Bb, 1, 1)

    # ---- sums for volume error / uncertainty ----------------------------------
    dsum = jnp.sum(jnp.sum(dens, axis=2, keepdims=True), axis=1, keepdims=True)
    z = 2.0 * dens - 1.0
    usum = jnp.sum(jnp.sum(jnp.exp(-6.5 * z * z), axis=2, keepdims=True),
                   axis=1, keepdims=True)

    # ---- 3x3 checkerboard conv (VALID), shared-tap form ------------------------
    dl0 = dens[:, :, 0:W - 2]
    dl1 = dens[:, :, 1:W - 1]
    dl2 = dens[:, :, 2:W]
    A = dl0 - dl1 + dl2                        # kernel rows 0 and 2
    M = dl0 + dl2                              # -(kernel row 1)
    conv = A[:, 0:H - 2, :] + A[:, 2:H, :] - M[:, 1:H - 1, :]   # (Bb, H-2, W-2)
    cb_sum = 0.25 * jnp.sum(jnp.sum(jnp.abs(conv), axis=2, keepdims=True),
                            axis=1, keepdims=True)

    # ---- pack the 4 per-batch partials into one lane-packed output block ------
    out_ref[:, :, 0:1] = comp_term
    out_ref[:, :, 1:2] = dsum
    out_ref[:, :, 2:3] = usum
    out_ref[:, :, 3:4] = cb_sum


def _pick_batch_block(B, H, W):
    """Largest divisor of B (capped at 8) whose per-step working set stays small."""
    per_sample = 4 * (12 * H * W + 3 * W * W)        # rough f32 working set / sample
    cap = max(1, min(8, (6 * 1024 * 1024) // max(per_sample, 1)))
    bb = 1
    for d in range(1, B + 1):
        if B % d == 0 and d <= cap:
            bb = d
    return bb


@partial(jax.jit, static_argnames=("penalization",))
def pallas_loss(densities, compliances, volume_fraction, penalization):
    """densities: (B,H,W) f32, compliances: (B, W*H) f32 (torch flat order),
    volume_fraction: (B,1) f32, penalization: Python float. Returns scalar loss."""
    B, H, W = densities.shape
    densities = densities.astype(jnp.float32)
    # Metadata-only reshape (no HBM transpose pass); the layout mismatch against
    # densities is handled in-kernel via the trace(comp @ dens^-p) contraction.
    comp_wh = compliances.astype(jnp.float32).reshape(B, W, H)

    Bb = _pick_batch_block(B, H, W)
    kernel = partial(_loss_kernel, penalization=float(penalization))

    partials = pl.pallas_call(
        kernel,
        grid=(B // Bb,),
        in_specs=[
            pl.BlockSpec((Bb, H, W), lambda b: (b, 0, 0)),   # densities block
            pl.BlockSpec((Bb, W, H), lambda b: (b, 0, 0)),   # compliances block
        ],
        out_specs=pl.BlockSpec((Bb, 1, 4), lambda b: (b, 0, 0)),
        out_shape=jax.ShapeDtypeStruct((B, 1, 4), jnp.float32),
        compiler_params=pltpu.CompilerParams(
            dimension_semantics=("parallel",),        # batch axis -> both TCs on v7x
            vmem_limit_bytes=32 * 1024 * 1024,
        ),
    )(densities, comp_wh)

    # ---- tiny scalar epilogue on (B,)-sized partials (outside the kernel) ------
    comp_term = partials[:, 0, 0]
    dens_sum = partials[:, 0, 1]
    unc_sum = partials[:, 0, 2]
    cb_sum = partials[:, 0, 3]

    n_spatial = float(H * W)
    vf = volume_fraction.astype(jnp.float32).reshape(B)
    vol_err = jnp.abs(vf - dens_sum / n_spatial)
    unc = unc_sum / n_spatial
    cb_v = jnp.sum(cb_sum) / float(B * (H - 2) * (W - 2))
    cb_err = (jnp.exp(cb_v * 3.0) - 1.0) / (math.exp(3.0) - 1.0)
    # alpha = gamma = delta = 1, beta = 5
    loss = jnp.mean((comp_term + 1.0) * (5.0 * vol_err + 1.0)
                    * (cb_err + 1.0) * (unc + 1.0))
    return loss


def loss_ref(densities, compliances, volume_fraction, penalization):
    """Pure-JAX reference mirroring the torch forward pass."""
    B, H, W = densities.shape
    dflat = jnp.transpose(densities, (0, 2, 1)).reshape(B, W * H)
    comp = jnp.sum(compliances / jnp.power(dflat, penalization), axis=1)
    vf = volume_fraction[:, 0]
    vol_err = jnp.abs(vf - jnp.mean(densities, axis=(1, 2)))
    k = 0.25 * jnp.array([[1, -1, 1], [-1, 0, -1], [1, -1, 1]], jnp.float32)
    conv = lax.conv_general_dilated(
        densities[:, None, :, :], k[None, None, :, :], (1, 1), "VALID",
        dimension_numbers=("NCHW", "OIHW", "NCHW"))
    cb_v = jnp.mean(jnp.abs(conv))
    cb_err = (jnp.exp(cb_v * 3.0) - 1.0) / (math.exp(3.0) - 1.0)
    unc = jnp.mean(jnp.exp(-6.5 * (2.0 * densities - 1.0) ** 2), axis=(1, 2))
    return jnp.mean((comp + 1.0) * (5.0 * vol_err + 1.0) * (cb_err + 1.0) * (unc + 1.0))


if __name__ == "__main__":
    B, H, W = 2, 16, 16
    key = jax.random.PRNGKey(0)
    k1, k2, k3 = jax.random.split(key, 3)
    densities = jax.random.uniform(k1, (B, H, W), jnp.float32, minval=0.1, maxval=0.9)
    compliances = jax.random.uniform(k2, (B, W * H), jnp.float32, minval=0.0, maxval=1.0)
    volume_fraction = jax.random.uniform(k3, (B, 1), jnp.float32, minval=0.3, maxval=0.6)
    penalization = 3.0

    out = pallas_loss(densities, compliances, volume_fraction, penalization=penalization)
    out = jax.block_until_ready(out)

    ref = loss_ref(densities, compliances, volume_fraction, penalization)
    ref = jax.block_until_ready(ref)

    assert jnp.allclose(out, ref, rtol=1e-2, atol=1e-4), (out, ref)
    print("KERNEL_OK")
</pallas_src>

<mosaic_0001>
module attributes {stable_mosaic.version = 11 : i64} {
  func.func @_loss_kernel(%arg0: i32, %arg1: memref<2x16x16xf32, #tpu.memory_space<vmem>>, %arg2: memref<2x16x16xf32, #tpu.memory_space<vmem>>, %arg3: memref<2x1x4xf32, #tpu.memory_space<vmem>>) attributes {dimension_semantics = [#tpu.dimension_semantics<parallel>], iteration_bounds = array<i64: 1>, scalar_prefetch = 0 : i64, scratch_operands = 0 : i64, tpu.core_type = #tpu.core_type<tc>, window_params = [{transform_indices = @transform_0, window_bounds = array<i64: 2, 16, 16>}, {transform_indices = @transform_1, window_bounds = array<i64: 2, 16, 16>}, {transform_indices = @transform_2, window_bounds = array<i64: 2, 1, 4>}]} {
    %c0 = arith.constant 0 : index
    %c0_0 = arith.constant 0 : index
    %c0_1 = arith.constant 0 : index
    %0 = vector.load %arg1[%c0, %c0_0, %c0_1] : memref<2x16x16xf32, #tpu.memory_space<vmem>>, vector<2x16x16xf32>
    %c0_2 = arith.constant 0 : index
    %c0_3 = arith.constant 0 : index
    %c0_4 = arith.constant 0 : index
    %1 = vector.load %arg2[%c0_2, %c0_3, %c0_4] : memref<2x16x16xf32, #tpu.memory_space<vmem>>, vector<2x16x16xf32>
    %2 = tpu.reciprocal %0 : vector<2x16x16xf32> -> vector<2x16x16xf32>
    %3 = arith.mulf %2, %2 : vector<2x16x16xf32>
    %4 = arith.mulf %2, %3 : vector<2x16x16xf32>
    "tpu.trace_start"() <{level = 10 : i32, message = "bwh,bhk->bwk"}> : () -> ()
    %cst = arith.constant dense<0.000000e+00> : vector<2x16x16xf32>
    %5 = tpu.matmul %1, %4, %cst {dimension_numbers = #tpu.dot_dimension_numbers<[2], [1], [1], [2], [0, 0, 0, 1, 1, 2], [0], [0]>} : vector<2x16x16xf32>, vector<2x16x16xf32>, vector<2x16x16xf32> -> vector<2x16x16xf32>
    "tpu.trace_stop"() : () -> ()
    %6 = tpu.iota {dimensions = array<i32: 1>} : vector<2x16x16xi32>
    %7 = tpu.iota {dimensions = array<i32: 2>} : vector<2x16x16xi32>
    %8 = arith.cmpi eq, %6, %7 : vector<2x16x16xi32>
    %cst_5 = arith.constant 0.000000e+00 : f32
    %9 = vector.broadcast %cst_5 : f32 to vector<2x16x16xf32>
    %10 = arith.select %8, %5, %9 : vector<2x16x16xi1>, vector<2x16x16xf32>
    %cst_6 = arith.constant dense<0.000000e+00> : vector<2x16xf32>
    %11 = vector.multi_reduction <add>, %10, %cst_6 [2] : vector<2x16x16xf32> to vector<2x16xf32>
    %12 = vector.shape_cast %11 : vector<2x16xf32> to vector<2x16x1xf32>
    %cst_7 = arith.constant dense<0.000000e+00> : vector<2x1xf32>
    %13 = vector.multi_reduction <add>, %12, %cst_7 [1] : vector<2x16x1xf32> to vector<2x1xf32>
    %14 = vector.shape_cast %13 : vector<2x1xf32> to vector<2x1x1xf32>
    %cst_8 = arith.constant dense<0.000000e+00> : vector<2x16xf32>
    %15 = vector.multi_reduction <add>, %0, %cst_8 [2] : vector<2x16x16xf32> to vector<2x16xf32>
    %16 = vector.shape_cast %15 : vector<2x16xf32> to vector<2x16x1xf32>
    %cst_9 = arith.constant dense<0.000000e+00> : vector<2x1xf32>
    %17 = vector.multi_reduction <add>, %16, %cst_9 [1] : vector<2x16x1xf32> to vector<2x1xf32>
    %18 = vector.shape_cast %17 : vector<2x1xf32> to vector<2x1x1xf32>
    %cst_10 = arith.constant 2.000000e+00 : f32
    %19 = vector.broadcast %cst_10 : f32 to vector<2x16x16xf32>
    %20 = arith.mulf %19, %0 : vector<2x16x16xf32>
    %cst_11 = arith.constant 1.000000e+00 : f32
    %21 = vector.broadcast %cst_11 : f32 to vector<2x16x16xf32>
    %22 = arith.subf %20, %21 : vector<2x16x16xf32>
    %cst_12 = arith.constant -6.500000e+00 : f32
    %23 = vector.broadcast %cst_12 : f32 to vector<2x16x16xf32>
    %24 = arith.mulf %23, %22 : vector<2x16x16xf32>
    %25 = arith.mulf %24, %22 : vector<2x16x16xf32>
    %26 = math.exp %25 : vector<2x16x16xf32>
    %cst_13 = arith.constant dense<0.000000e+00> : vector<2x16xf32>
    %27 = vector.multi_reduction <add>, %26, %cst_13 [2] : vector<2x16x16xf32> to vector<2x16xf32>
    %28 = vector.shape_cast %27 : vector<2x16xf32> to vector<2x16x1xf32>
    %cst_14 = arith.constant dense<0.000000e+00> : vector<2x1xf32>
    %29 = vector.multi_reduction <add>, %28, %cst_14 [1] : vector<2x16x1xf32> to vector<2x1xf32>
    %30 = vector.shape_cast %29 : vector<2x1xf32> to vector<2x1x1xf32>
    %31 = vector.extract_strided_slice %0 {offsets = [0, 0, 0], sizes = [2, 16, 14], strides = [1, 1, 1]} : vector<2x16x16xf32> to vector<2x16x14xf32>
    %32 = vector.extract_strided_slice %0 {offsets = [0, 0, 1], sizes = [2, 16, 14], strides = [1, 1, 1]} : vector<2x16x16xf32> to vector<2x16x14xf32>
    %33 = vector.extract_strided_slice %0 {offsets = [0, 0, 2], sizes = [2, 16, 14], strides = [1, 1, 1]} : vector<2x16x16xf32> to vector<2x16x14xf32>
    %34 = arith.subf %31, %32 : vector<2x16x14xf32>
    %35 = arith.addf %34, %33 : vector<2x16x14xf32>
    %36 = arith.addf %31, %33 : vector<2x16x14xf32>
    %37 = vector.extract_strided_slice %35 {offsets = [0, 0, 0], sizes = [2, 14, 14], strides = [1, 1, 1]} : vector<2x16x14xf32> to vector<2x14x14xf32>
    %38 = vector.extract_strided_slice %35 {offsets = [0, 2, 0], sizes = [2, 14, 14], strides = [1, 1, 1]} : vector<2x16x14xf32> to vector<2x14x14xf32>
    %39 = arith.addf %37, %38 : vector<2x14x14xf32>
    %40 = vector.extract_strided_slice %36 {offsets = [0, 1, 0], sizes = [2, 14, 14], strides = [1, 1, 1]} : vector<2x16x14xf32> to vector<2x14x14xf32>
    %41 = arith.subf %39, %40 : vector<2x14x14xf32>
    %42 = math.absf %41 : vector<2x14x14xf32>
    %cst_15 = arith.constant dense<0.000000e+00> : vector<2x14xf32>
    %43 = vector.multi_reduction <add>, %42, %cst_15 [2] : vector<2x14x14xf32> to vector<2x14xf32>
    %44 = vector.shape_cast %43 : vector<2x14xf32> to vector<2x14x1xf32>
    %cst_16 = arith.constant dense<0.000000e+00> : vector<2x1xf32>
    %45 = vector.multi_reduction <add>, %44, %cst_16 [1] : vector<2x14x1xf32> to vector<2x1xf32>
    %46 = vector.shape_cast %45 : vector<2x1xf32> to vector<2x1x1xf32>
    %cst_17 = arith.constant 2.500000e-01 : f32
    %47 = vector.broadcast %cst_17 : f32 to vector<2x1x1xf32>
    %48 = arith.mulf %47, %46 : vector<2x1x1xf32>
    %c0_18 = arith.constant 0 : index
    %c0_19 = arith.constant 0 : index
    %c0_20 = arith.constant 0 : index
    %49 = vector.load %arg3[%c0_18, %c0_19, %c0_20] : memref<2x1x4xf32, #tpu.memory_space<vmem>>, vector<2x1x1xf32>
    tpu.vector_store %arg3[%c0_18, %c0_19, %c0_20], %14 {strides = array<i32>} : memref<2x1x4xf32, #tpu.memory_space<vmem>>, vector<2x1x1xf32>,
    %c0_21 = arith.constant 0 : index
    %c0_22 = arith.constant 0 : index
    %c1 = arith.constant 1 : index
    %50 = vector.load %arg3[%c0_21, %c0_22, %c1] : memref<2x1x4xf32, #tpu.memory_space<vmem>>, vector<2x1x1xf32>
    tpu.vector_store %arg3[%c0_21, %c0_22, %c1], %18 {strides = array<i32>} : memref<2x1x4xf32, #tpu.memory_space<vmem>>, vector<2x1x1xf32>,
    %c0_23 = arith.constant 0 : index
    %c0_24 = arith.constant 0 : index
    %c2 = arith.constant 2 : index
    %51 = vector.load %arg3[%c0_23, %c0_24, %c2] : memref<2x1x4xf32, #tpu.memory_space<vmem>>, vector<2x1x1xf32>
    tpu.vector_store %arg3[%c0_23, %c0_24, %c2], %30 {strides = array<i32>} : memref<2x1x4xf32, #tpu.memory_space<vmem>>, vector<2x1x1xf32>,
    %c0_25 = arith.constant 0 : index
    %c0_26 = arith.constant 0 : index
    %c3 = arith.constant 3 : index
    %52 = vector.load %arg3[%c0_25, %c0_26, %c3] : memref<2x1x4xf32, #tpu.memory_space<vmem>>, vector<2x1x1xf32>
    tpu.vector_store %arg3[%c0_25, %c0_26, %c3], %48 {strides = array<i32>} : memref<2x1x4xf32, #tpu.memory_space<vmem>>, vector<2x1x1xf32>,
    return
  }
  func.func @transform_0(%arg0: i32) -> (i32, i32, i32) {
    %c0_i32 = arith.constant 0 : i32
    %c0_i32_0 = arith.constant 0 : i32
    %c0_i32_1 = arith.constant 0 : i32
    return %arg0, %c0_i32, %c0_i32_0 : i32, i32, i32
  }
  func.func @transform_1(%arg0: i32) -> (i32, i32, i32) {
    %c0_i32 = arith.constant 0 : i32
    %c0_i32_0 = arith.constant 0 : i32
    %c0_i32_1 = arith.constant 0 : i32
    return %arg0, %c0_i32, %c0_i32_0 : i32, i32, i32
  }
  func.func @transform_2(%arg0: i32) -> (i32, i32, i32) {
    %c0_i32 = arith.constant 0 : i32
    %c0_i32_0 = arith.constant 0 : i32
    %c0_i32_1 = arith.constant 0 : i32
    return %arg0, %c0_i32, %c0_i32_0 : i32, i32, i32
  }
}

</mosaic_0001>

<llo_original>
// kernel: pallas_loss.1
$region0: #{pallas_loss.1}
  #allocation0 [shape = 'u32[]', space=smem, size = 0x4, offset = 0x4, fixed_abs, tag = 'smem constant byte address 0x4 - core index']
  #allocation1 [shape = 'u32[144,128]{1,0:T(1,128)}', space=vmem, size = 0x12000, scoped, tag = 'internal scratch']
  %s0 = inlined_call_operand.vmem [shape: f32[2,16,16], index: 0, kind: input, shape index: {}]
  %s1 = inlined_call_operand.vmem [shape: f32[2,16,16], index: 1, kind: input, shape index: {}]
  %s2 = inlined_call_operand.vmem [shape: f32[2,1,4], index: 2, kind: output, shape index: {}]
  %s3 = sld [smem:[#allocation0]]
  $region18: #{pallas_loss.1} parent=0
    _
  %s5 = ssub.s32 1, %s3
  %s6 = scalar_select 0, %s5, %s3
  // Predicated region
  $region2: #{pallas_loss.1} parent=0 // pred_check
    _
  $region3: #{pallas_loss.1} parent=0 // pred_check_branch
    %8 = sbr.rel (0) target = $region5
  $region4: #{pallas_loss.1} parent=0 // pred_region
    _
  $region5: #{pallas_loss.1} parent=0 // pred_fallthru
    _
  // Predicated region
  $region6: #{pallas_loss.1} parent=0 // pred_check
    _
  $region7: #{pallas_loss.1} parent=0 // pred_check_branch
    %10 = sbr.rel (0) target = $region9
  $region8: #{pallas_loss.1} parent=0 // pred_region
    _
  $region9: #{pallas_loss.1} parent=0 // pred_fallthru
    _
  %v11 = vld [vmem:[%s0] sm:$0xff]
  %v12 = vld [vmem:[%s0 + $0x8] sm:$0xff]
  %v13 = vld [vmem:[%s0 + $0x10] sm:$0xff]
  %v14 = vld [vmem:[%s0 + $0x18] sm:$0xff]
  %v15 = vld [vmem:[%s1] sm:$0xff]
  %v16 = vld [vmem:[%s1 + $0x8] sm:$0xff]
  %v17 = vld [vmem:[%s1 + $0x10] sm:$0xff]
  %v18 = vld [vmem:[%s1 + $0x18] sm:$0xff]
  %v19 = vrcp.pop %v11
  %v20 = vrcp.pop %v12
  %v21 = vrcp.pop %v13
  %v22 = vrcp.pop %v14
  %v23 = vmul.f32 %v19, %v19
  %v24 = vmul.f32 %v20, %v20
  %v25 = vmul.f32 %v21, %v21
  %v26 = vmul.f32 %v22, %v22
  %v27 = vmul.f32 %v19, %v23
  %v28 = vmul.f32 %v20, %v24
  %v29 = vmul.f32 %v21, %v25
  %v30 = vmul.f32 %v22, %v26
  %vm31 = vcmask 130048
  %v33 = vsel %vm31, %v15, 0
  %v36 = vsel %vm31, %v16, 0
  %38 = vmatprep.subr.mxu0 0.0
  %39 = vmatpush1.msra.mxu0 0.0
  %40 = vmatprep.subr.mxu0 0.0
  %41 = vmatpush1.msra.mxu0 0.0
  %42 = vmatprep.subr.mxu0 0.0
  %43 = vmatpush1.msra.mxu0 0.0
  %44 = vmatprep.subr.mxu0 0.0
  %45 = vmatpush1.msra.mxu0 0.0
  %46 = vmatprep.subr.mxu0 0.0
  %47 = vmatpush1.msra.mxu0 0.0
  %48 = vmatprep.subr.mxu0 0.0
  %49 = vmatpush1.msra.mxu0 0.0
  %50 = vmatprep.subr.mxu0 0.0
  %51 = vmatpush1.msra.mxu0 0.0
  %52 = vmatprep.subr.mxu0 0.0
  %53 = vmatpush1.msra.mxu0 0.0
  %54 = vmatprep.subr.mxu0 0.0
  %55 = vmatpush1.msra.mxu0 0.0
  %56 = vmatprep.subr.mxu0 0.0
  %57 = vmatpush1.msra.mxu0 0.0
  %58 = vmatprep.subr.mxu0 0.0
  %59 = vmatpush1.msra.mxu0 0.0
  %60 = vmatprep.subr.mxu0 0.0
  %61 = vmatpush1.msra.mxu0 0.0
  %62 = vmatprep.subr.mxu0 0.0
  %63 = vmatpush1.msra.mxu0 0.0
  %64 = vmatprep.subr.mxu0 0.0
  %65 = vmatpush1.msra.mxu0 0.0
  %66 = vmatprep.subr.mxu0 0.0
  %67 = vmatpush1.msra.mxu0 %v28
  %68 = vmatprep.subr.mxu0 0.0
  %69 = vmatpush1.msra.mxu0 %v27
  %70 = vmatprep.subr.mxu0 0.0
  %71 = vmatpush2.msra.mxu0 0.0
  %72 = vmatprep.subr.mxu0 0.0
  %73 = vmatpush2.msra.mxu0 0.0
  %74 = vmatprep.subr.mxu0 0.0
  %75 = vmatpush2.msra.mxu0 0.0
  %76 = vmatprep.subr.mxu0 0.0
  %77 = vmatpush2.msra.mxu0 0.0
  %78 = vmatprep.subr.mxu0 0.0
  %79 = vmatpush2.msra.mxu0 0.0
  %80 = vmatprep.subr.mxu0 0.0
  %81 = vmatpush2.msra.mxu0 0.0
  %82 = vmatprep.subr.mxu0 0.0
  %83 = vmatpush2.msra.mxu0 0.0
  %84 = vmatprep.subr.mxu0 0.0
  %85 = vmatpush2.msra.mxu0 0.0
  %86 = vmatprep.subr.mxu0 0.0
  %87 = vmatpush2.msra.mxu0 0.0
  %88 = vmatprep.subr.mxu0 0.0
  %89 = vmatpush2.msra.mxu0 0.0
  %90 = vmatprep.subr.mxu0 0.0
  %91 = vmatpush2.msra.mxu0 0.0
  %92 = vmatprep.subr.mxu0 0.0
  %93 = vmatpush2.msra.mxu0 0.0
  %94 = vmatprep.subr.mxu0 0.0
  %95 = vmatpush2.msra.mxu0 0.0
  %96 = vmatprep.subr.mxu0 0.0
  %97 = vmatpush2.msra.mxu0 0.0
  %98 = vmatprep.subr.mxu0 0.0
  %99 = vmatpush2.msra.mxu0 0.0
  %100 = vmatprep.subr.mxu0 0.0
  %101 = vmatpush2.msra.mxu0 0.0
  %102 = vmatprep.mubr.f32.mxu0 0.0
  %103 = vmatmul.mubr.f32.gmra.mxu0 %v33
  %v104 = vpop.f32.mrf.mxu0
  %v105 = vadd.f32 0.0, %v104
  %v106 = vpop.f32.mrf.mxu0
  %107 = vmatprep.mubr.f32.mxu0 0.0
  %108 = vmatmul.mubr.f32.gmra.mxu0 %v36
  %v109 = vpop.f32.mrf.mxu0
  %v110 = vadd.f32 0.0, %v109
  %v111 = vpop.f32.mrf.mxu0
  %112 = vdwg.mxu0
  %v114 = vsel %vm31, %v17, 0
  %v117 = vsel %vm31, %v18, 0
  %119 = vmatprep.subr.mxu0 0.0
  %120 = vmatpush1.msra.mxu0 0.0
  %121 = vmatprep.subr.mxu0 0.0
  %122 = vmatpush1.msra.mxu0 0.0
  %123 = vmatprep.subr.mxu0 0.0
  %124 = vmatpush1.msra.mxu0 0.0
  %125 = vmatprep.subr.mxu0 0.0
  %126 = vmatpush1.msra.mxu0 0.0
  %127 = vmatprep.subr.mxu0 0.0
  %128 = vmatpush1.msra.mxu0 0.0
  %129 = vmatprep.subr.mxu0 0.0
  %130 = vmatpush1.msra.mxu0 0.0
  %131 = vmatprep.subr.mxu0 0.0
  %132 = vmatpush1.msra.mxu0 0.0
  %133 = vmatprep.subr.mxu0 0.0
  %134 = vmatpush1.msra.mxu0 0.0
  %135 = vmatprep.subr.mxu0 0.0
  %136 = vmatpush1.msra.mxu0 0.0
  %137 = vmatprep.subr.mxu0 0.0
  %138 = vmatpush1.msra.mxu0 0.0
  %139 = vmatprep.subr.mxu0 0.0
  %140 = vmatpush1.msra.mxu0 0.0
  %141 = vmatprep.subr.mxu0 0.0
  %142 = vmatpush1.msra.mxu0 0.0
  %143 = vmatprep.subr.mxu0 0.0
  %144 = vmatpush1.msra.mxu0 0.0
  %145 = vmatprep.subr.mxu0 0.0
  %146 = vmatpush1.msra.mxu0 0.0
  %147 = vmatprep.subr.mxu0 0.0
  %148 = vmatpush1.msra.mxu0 %v30
  %149 = vmatprep.subr.mxu0 0.0
  %150 = vmatpush1.msra.mxu0 %v29
  %151 = vmatprep.subr.mxu0 0.0
  %152 = vmatpush2.msra.mxu0 0.0
  %153 = vmatprep.subr.mxu0 0.0
  %154 = vmatpush2.msra.mxu0 0.0
  %155 = vmatprep.subr.mxu0 0.0
  %156 = vmatpush2.msra.mxu0 0.0
  %157 = vmatprep.subr.mxu0 0.0
  %158 = vmatpush2.msra.mxu0 0.0
  %159 = vmatprep.subr.mxu0 0.0
  %160 = vmatpush2.msra.mxu0 0.0
  %161 = vmatprep.subr.mxu0 0.0
  %162 = vmatpush2.msra.mxu0 0.0
  %163 = vmatprep.subr.mxu0 0.0
  %164 = vmatpush2.msra.mxu0 0.0
  %165 = vmatprep.subr.mxu0 0.0
  %166 = vmatpush2.msra.mxu0 0.0
  %167 = vmatprep.subr.mxu0 0.0
  %168 = vmatpush2.msra.mxu0 0.0
  %169 = vmatprep.subr.mxu0 0.0
  %170 = vmatpush2.msra.mxu0 0.0
  %171 = vmatprep.subr.mxu0 0.0
  %172 = vmatpush2.msra.mxu0 0.0
  %173 = vmatprep.subr.mxu0 0.0
  %174 = vmatpush2.msra.mxu0 0.0
  %175 = vmatprep.subr.mxu0 0.0
  %176 = vmatpush2.msra.mxu0 0.0
  %177 = vmatprep.subr.mxu0 0.0
  %178 = vmatpush2.msra.mxu0 0.0
  %179 = vmatprep.subr.mxu0 0.0
  %180 = vmatpush2.msra.mxu0 0.0
  %181 = vmatprep.subr.mxu0 0.0
  %182 = vmatpush2.msra.mxu0 0.0
  %183 = vmatprep.mubr.f32.mxu0 0.0
  %184 = vmatmul.mubr.f32.gmra.mxu0 %v114
  %v185 = vpop.f32.mrf.mxu0
  %v186 = vadd.f32 0.0, %v185
  %v187 = vpop.f32.mrf.mxu0
  %188 = vmatprep.mubr.f32.mxu0 0.0
  %189 = vmatmul.mubr.f32.gmra.mxu0 %v117
  %v190 = vpop.f32.mrf.mxu0
  %v191 = vadd.f32 0.0, %v190
  %v192 = vpop.f32.mrf.mxu0
  %193 = vdwg.mxu0
  %v194 = vlaneseq
  %v195 = vshrl.u32 %v194, 7
  %v196 = vadd.s32 %v195, 8
  %v197 = vlaneseq
  %v198 = vand.u32 %v197, 127
  %vm199 = vcmp.eq.s32.totalorder %v195, %v198
  %vm200 = vcmp.eq.s32.totalorder %v196, %v198
  %v201 = vsel %vm199, %v105, 0.0
  %v202 = vsel %vm200, %v110, 0.0
  %v203 = vsel %vm199, %v186, 0.0
  %v204 = vsel %vm200, %v191, 0.0
  %v205 = vsel %vm31, %v201, 0.0
  %206 = vadd.xlane.f32.xlu0 %v205
  %v207 = vpop.xlane.xlu0 %206
  %v208 = vsel %vm31, %v202, 0.0
  %209 = vadd.xlane.f32.xlu0 %v208
  %v210 = vpop.xlane.xlu0 %209
  %v211 = vsel %vm31, %v203, 0.0
  %212 = vadd.xlane.f32.xlu0 %v211
  %v213 = vpop.xlane.xlu0 %212
  %v214 = vsel %vm31, %v204, 0.0
  %215 = vadd.xlane.f32.xlu0 %v214
  %v216 = vpop.xlane.xlu0 %215
  %v217 = vadd.f32 %v207, %v210
  %v218 = vrot.slane %v217, 4
  %v219 = vadd.f32 %v217, %v218
  %v220 = vrot.slane %v219, 2
  %v221 = vadd.f32 %v219, %v220
  %v222 = vrot.slane %v221, 1
  %v223 = vadd.f32 %v221, %v222
  %v224 = vadd.f32 %v213, %v216
  %v225 = vrot.slane %v224, 4
  %v226 = vadd.f32 %v224, %v225
  %v227 = vrot.slane %v226, 2
  %v228 = vadd.f32 %v226, %v227
  %v229 = vrot.slane %v228, 1
  %v230 = vadd.f32 %v228, %v229
  %v231 = vsel %vm31, %v11, 0.0
  %232 = vadd.xlane.f32.xlu0 %v231
  %v233 = vpop.xlane.xlu0 %232
  %v234 = vsel %vm31, %v12, 0.0
  %235 = vadd.xlane.f32.xlu0 %v234
  %v236 = vpop.xlane.xlu0 %235
  %v237 = vsel %vm31, %v13, 0.0
  %238 = vadd.xlane.f32.xlu0 %v237
  %v239 = vpop.xlane.xlu0 %238
  %v240 = vsel %vm31, %v14, 0.0
  %241 = vadd.xlane.f32.xlu0 %v240
  %v242 = vpop.xlane.xlu0 %241
  %v243 = vadd.f32 %v233, %v236
  %v244 = vrot.slane %v243, 4
  %v245 = vadd.f32 %v243, %v244
  %v246 = vrot.slane %v245, 2
  %v247 = vadd.f32 %v245, %v246
  %v248 = vrot.slane %v247, 1
  %v249 = vadd.f32 %v247, %v248
  %v250 = vadd.f32 %v239, %v242
  %v251 = vrot.slane %v250, 4
  %v252 = vadd.f32 %v250, %v251
  %v253 = vrot.slane %v252, 2
  %v254 = vadd.f32 %v252, %v253
  %v255 = vrot.slane %v254, 1
  %v256 = vadd.f32 %v254, %v255
  %v257 = vmul.f32 %v11, 2.0
  %v258 = vmul.f32 %v12, 2.0
  %v259 = vmul.f32 %v13, 2.0
  %v260 = vmul.f32 %v14, 2.0
  %v261 = vsub.f32 %v257, 1.0
  %v262 = vsub.f32 %v258, 1.0
  %v263 = vsub.f32 %v259, 1.0
  %v264 = vsub.f32 %v260, 1.0
  %v265 = vmul.f32 %v261, -6.5
  %v266 = vmul.f32 %v262, -6.5
  %v267 = vmul.f32 %v263, -6.5
  %v268 = vmul.f32 %v264, -6.5
  %v269 = vmul.f32 %v265, %v261
  %v270 = vmul.f32 %v266, %v262
  %v271 = vmul.f32 %v267, %v263
  %v272 = vmul.f32 %v268, %v264
  %v273 = vmul.f32 %v269, 1.442695
  %v274 = vpow.pop %v273
  %v275 = vmul.f32 %v270, 1.442695
  %v276 = vpow.pop %v275
  %v277 = vmul.f32 %v271, 1.442695
  %v278 = vpow.pop %v277
  %v279 = vmul.f32 %v272, 1.442695
  %v280 = vpow.pop %v279
  %v281 = vsel %vm31, %v274, 0.0
  %282 = vadd.xlane.f32.xlu0 %v281
  %v283 = vpop.xlane.xlu0 %282
  %v284 = vsel %vm31, %v276, 0.0
  %285 = vadd.xlane.f32.xlu0 %v284
  %v286 = vpop.xlane.xlu0 %285
  %v287 = vsel %vm31, %v278, 0.0
  %288 = vadd.xlane.f32.xlu0 %v287
  %v289 = vpop.xlane.xlu0 %288
  %v290 = vsel %vm31, %v280, 0.0
  %291 = vadd.xlane.f32.xlu0 %v290
  %v292 = vpop.xlane.xlu0 %291
  %v293 = vadd.f32 %v283, %v286
  %v294 = vrot.slane %v293, 4
  %v295 = vadd.f32 %v293, %v294
  %v296 = vrot.slane %v295, 2
  %v297 = vadd.f32 %v295, %v296
  %v298 = vrot.slane %v297, 1
  %v299 = vadd.f32 %v297, %v298
  %v300 = vadd.f32 %v289, %v292
  %v301 = vrot.slane %v300, 4
  %v302 = vadd.f32 %v300, %v301
  %v303 = vrot.slane %v302, 2
  %v304 = vadd.f32 %v302, %v303
  %v305 = vrot.slane %v304, 1
  %v306 = vadd.f32 %v304, %v305
  %311 = vrot.lane.b32.xlu0 %v11, 127
  %v312 = vpop.permute.xlu0 %311
  %313 = vrot.lane.b32.xlu0 %v12, 127
  %v314 = vpop.permute.xlu0 %313
  %315 = vrot.lane.b32.xlu0 %v13, 127
  %v316 = vpop.permute.xlu0 %315
  %317 = vrot.lane.b32.xlu0 %v14, 127
  %v318 = vpop.permute.xlu0 %317
  %v323 = vsub.f32 %v11, %v312
  %v324 = vsub.f32 %v12, %v314
  %v325 = vsub.f32 %v13, %v316
  %v326 = vsub.f32 %v14, %v318
  %327 = vrot.lane.b32.xlu0 %v11, 126
  %v328 = vpop.permute.xlu0 %327
  %329 = vrot.lane.b32.xlu0 %v12, 126
  %v330 = vpop.permute.xlu0 %329
  %331 = vrot.lane.b32.xlu0 %v13, 126
  %v332 = vpop.permute.xlu0 %331
  %333 = vrot.lane.b32.xlu0 %v14, 126
  %v334 = vpop.permute.xlu0 %333
  %v339 = vadd.f32 %v323, %v328
  %v340 = vadd.f32 %v324, %v330
  %v341 = vadd.f32 %v325, %v332
  %v342 = vadd.f32 %v326, %v334
  %v343 = vadd.f32 %v11, %v328
  %v344 = vadd.f32 %v12, %v330
  %v345 = vadd.f32 %v13, %v332
  %v346 = vadd.f32 %v14, %v334
  %vm351 = vcmask 1045504
  %v352 = vrot.slane %v339, 2
  %v353 = vrot.slane %v340, 2
  %v354 = vsel %vm351, %v352, %v353
  %v355 = vrot.slane %v341, 2
  %v356 = vrot.slane %v342, 2
  %v357 = vsel %vm351, %v355, %v356
  %v362 = vadd.f32 %v339, %v354
  %v363 = vadd.f32 %v340, %v353
  %v364 = vadd.f32 %v341, %v357
  %v365 = vadd.f32 %v342, %v356
  %vm370 = vcmask 1046528
  %v371 = vrot.slane %v343, 1
  %v372 = vrot.slane %v344, 1
  %v373 = vsel %vm370, %v371, %v372
  %v374 = vrot.slane %v345, 1
  %v375 = vrot.slane %v346, 1
  %v376 = vsel %vm370, %v374, %v375
  %v381 = vsub.f32 %v362, %v373
  %v382 = vsub.f32 %v363, %v372
  %v383 = vsub.f32 %v364, %v376
  %v384 = vsub.f32 %v365, %v375
  %v385 = vand.u32 2147483647, %v381
  %v386 = vand.u32 2147483647, %v382
  %v387 = vand.u32 2147483647, %v383
  %v388 = vand.u32 2147483647, %v384
  %vm389 = vcmask 113664
  %v390 = vsel %vm389, %v385, 0.0
  %391 = vadd.xlane.f32.xlu0 %v390
  %v392 = vpop.xlane.xlu0 %391
  %vm393 = vcmask 111616
  %v394 = vsel %vm393, %v386, 0.0
  %395 = vadd.xlane.f32.xlu0 %v394
  %v396 = vpop.xlane.xlu0 %395
  %v397 = vsel %vm389, %v387, 0.0
  %398 = vadd.xlane.f32.xlu0 %v397
  %v399 = vpop.xlane.xlu0 %398
  %v400 = vsel %vm393, %v388, 0.0
  %401 = vadd.xlane.f32.xlu0 %v400
  %v402 = vpop.xlane.xlu0 %401
  %v403 = vsel %vm351, %v396, 0.0
  %v404 = vadd.f32 %v392, %v403
  %v405 = vrot.slane %v404, 4
  %v406 = vadd.f32 %v404, %v405
  %v407 = vrot.slane %v406, 2
  %v408 = vadd.f32 %v406, %v407
  %v409 = vrot.slane %v408, 1
  %v410 = vadd.f32 %v408, %v409
  %v411 = vsel %vm351, %v402, 0.0
  %v412 = vadd.f32 %v399, %v411
  %v413 = vrot.slane %v412, 4
  %v414 = vadd.f32 %v412, %v413
  %v415 = vrot.slane %v414, 2
  %v416 = vadd.f32 %v414, %v415
  %v417 = vrot.slane %v416, 1
  %v418 = vadd.f32 %v416, %v417
  %v419 = vmul.f32 %v410, 0.25
  %v420 = vmul.f32 %v418, 0.25
  %vm421 = vcmask 0
  %422 = vst.msk [vmem:[%s2] sm:$0x1] %vm421, %v223
  %423 = vst.msk [vmem:[%s2 + $0x1] sm:$0x1] %vm421, %v230
  %vm424 = vcmask 8200
  %425 = vst.msk [vmem:[%s2] sm:$0x1] %vm424, %v249
  %426 = vst.msk [vmem:[%s2 + $0x1] sm:$0x1] %vm424, %v256
  %vm427 = vcmask 16400
  %428 = vst.msk [vmem:[%s2] sm:$0x1] %vm427, %v299
  %429 = vst.msk [vmem:[%s2 + $0x1] sm:$0x1] %vm427, %v306
  %vm430 = vcmask 24600
  %431 = vst.msk [vmem:[%s2] sm:$0x1] %vm430, %v419
  %432 = vst.msk [vmem:[%s2 + $0x1] sm:$0x1] %vm430, %v420
  // Predicated region
  $region10: #{pallas_loss.1} parent=0 // pred_check
    _
  $region11: #{pallas_loss.1} parent=0 // pred_check_branch
    %434 = sbr.rel (0) target = $region13
  $region12: #{pallas_loss.1} parent=0 // pred_region
    _
  $region13: #{pallas_loss.1} parent=0 // pred_fallthru
    _
  // Predicated region
  $region14: #{pallas_loss.1} parent=0 // pred_check
    _
  $region15: #{pallas_loss.1} parent=0 // pred_check_branch
    %436 = sbr.rel (0) target = $region17
  $region16: #{pallas_loss.1} parent=0 // pred_region
    _
  $region17: #{pallas_loss.1} parent=0 // pred_fallthru
    _

</llo_original>
